<compile_context>
chip_gen: v6e
topology: v6e:2x2x1
jax: 0.10.0
libtpu: 0.0.40
codegen_flags: <defaults>
</compile_context>

<pallas_src>
import functools

import jax
import jax.numpy as jnp
from jax.experimental import pallas as pl
from jax.experimental.pallas import tpu as pltpu

LANE = 128
MAX_TILE_P = 2048                 # packed rows per grid step (tokens = PK * this)
VMEM_LIMIT = 32 * 1024 * 1024     # fits v5e/v6e scoped limit and v7x's 64 MiB VMEM
NEG_INF = -1e30                   # plain Python float (NOT a jax array -> no capture)


def _round_up(x, m):
    return (x + m - 1) // m * m


def _block_diag_table(table, pk):
    """(V, V) table -> (PK*V, PK*V) block-diagonal table (built once under jit)."""
    if pk == 1:
        return table
    v = table.shape[0]
    w = pk * v
    out = jnp.zeros((w, w), table.dtype)
    for k in range(pk):
        out = out.at[k * v:(k + 1) * v, k * v:(k + 1) * v].set(table)
    return out


def _packed_hits(ids, col, pk, v):
    """ids (TP, PK) int32, col (TP, W) iota -> (TP, W) bool indicator.

    Lane j is hit iff j == ids[:, k] + k*v for some segment k.  Ids >= W never
    match (used to drop padded targets).
    """
    hit = col == ids[:, 0:1]
    for k in range(1, pk):
        hit = hit | (col == (ids[:, k:k + 1] + k * v))
    return hit


# ---------------------------------------------------------------------------
# Kernel A (inference): packed embedding lookup only.
# ---------------------------------------------------------------------------
def _embed_kernel(x_ref, tbl_ref, out_ref, *, pk, v):
    tp, w = out_ref.shape
    col = jax.lax.broadcasted_iota(jnp.int32, (tp, w), 1)
    onehot = _packed_hits(x_ref[...], col, pk, v).astype(tbl_ref.dtype)
    out_ref[...] = jnp.dot(
        onehot, tbl_ref[...], preferred_element_type=jnp.float32
    ).astype(out_ref.dtype)


# ---------------------------------------------------------------------------
# Kernel B (training): fused embedding + per-step cross-entropy partial sum.
# ---------------------------------------------------------------------------
def _fused_kernel(ids_ref, tbl_ref, out_ref, part_ref, *, pk, v, n_valid, tile_p):
    i = pl.program_id(0)
    tp, w = out_ref.shape
    col = jax.lax.broadcasted_iota(jnp.int32, (tp, w), 1)

    ids = ids_ref[...]                              # (tp, 2*pk) int32
    x_hits = _packed_hits(ids[:, 0:pk], col, pk, v)

    # logits tile: one-hot(x) @ block_diag(table)  -> (TP, W), lane dense.
    logits = jnp.dot(x_hits.astype(tbl_ref.dtype), tbl_ref[...],
                     preferred_element_type=jnp.float32)
    out_ref[...] = logits.astype(out_ref.dtype)

    # Target logits in ONE packed pass.  Padded tokens were packed with the
    # out-of-range target id `w`, so they never match and contribute 0.
    tgt_hits = _packed_hits(ids[:, pk:2 * pk], col, pk, v)
    tgt_sum = jnp.sum(jnp.where(tgt_hits, logits, 0.0), axis=-1, keepdims=True)

    # Per-segment max, broadcast back to the full lane width -> single exp.
    seg_masks = []
    seg_maxes = []
    for k in range(pk):
        sm = (col >= k * v) & (col < (k + 1) * v)
        seg_masks.append(sm)
        seg_maxes.append(jnp.max(jnp.where(sm, logits, NEG_INF),
                                 axis=-1, keepdims=True))
    m_bcast = seg_maxes[-1]
    for k in range(pk - 1):
        m_bcast = jnp.where(seg_masks[k], seg_maxes[k], m_bcast)
    e = jnp.exp(logits - m_bcast)                   # one full-width EUP pass

    # Per-row loss = sum_k valid_k * lse_k  -  sum_k valid_k * tgt_logit_k.
    row = jax.lax.broadcasted_iota(jnp.int32, (tp, 1), 0) + i * tile_p
    loss_rows = -tgt_sum
    for k in range(pk):
        denom = jnp.sum(jnp.where(seg_masks[k], e, 0.0), axis=-1, keepdims=True)
        lse = seg_maxes[k] + jnp.log(denom)
        valid = ((row * pk + k) < n_valid).astype(jnp.float32)
        loss_rows = loss_rows + valid * lse

    # Per-step partial sum; final mean is done in the wrapper so this grid
    # axis stays "parallel" (v7x megacore) and accumulation is exact.
    part_ref[0, 0] = jnp.sum(loss_rows)


# ---------------------------------------------------------------------------
# CharV1 forward wrapper (mirrors the PyTorch module semantics).
# ---------------------------------------------------------------------------
def _char_v1_forward(x, tkn_emb_table, targets=None):
    B, S = x.shape
    V = tkn_emb_table.shape[0]
    N = B * S

    # Pack PK tokens per 128-lane row when the vocab divides the lane width.
    pk = LANE // V if (V <= LANE and LANE % V == 0) else 1
    w = pk * V
    p = -(-N // pk)                       # packed rows needed
    if p > MAX_TILE_P:
        tile_p = MAX_TILE_P
    elif p > 16:
        # Split into >=2 steps so the ("parallel",) grid can use both v7x TCs.
        tile_p = _round_up(-(-p // 2), 8)
    else:
        tile_p = _round_up(p, 8)          # sublane multiple
    p_pad = _round_up(p, tile_p)
    grid_steps = p_pad // tile_p
    n_pad = p_pad * pk

    tbl = _block_diag_table(tkn_emb_table.astype(jnp.float32), pk)

    tbl_spec = pl.BlockSpec((w, w), lambda i: (0, 0))
    logit_spec = pl.BlockSpec((tile_p, w), lambda i: (i, 0))

    def _id_spec(width):
        return pl.BlockSpec((tile_p, width), lambda i: (i, 0))

    def _unpack_logits(packed):
        logits = packed.reshape(n_pad, V)     # contiguous split of minor dim
        if n_pad != N:
            logits = logits[:N]
        return logits

    x_flat = x.reshape(-1).astype(jnp.int32)

    if targets is None:
        x_pk = jnp.pad(x_flat, (0, n_pad - N)).reshape(p_pad, pk)
        packed = pl.pallas_call(
            functools.partial(_embed_kernel, pk=pk, v=V),
            out_shape=jax.ShapeDtypeStruct((p_pad, w), jnp.float32),
            grid=(grid_steps,),
            in_specs=[_id_spec(pk), tbl_spec],
            out_specs=logit_spec,
            compiler_params=pltpu.CompilerParams(
                dimension_semantics=("parallel",),
                vmem_limit_bytes=VMEM_LIMIT),
        )(x_pk, tbl)
        # PyTorch returns (B, S, V) logits when targets is None.
        return _unpack_logits(packed).reshape(B, S, V), None

    t_flat = targets.reshape(-1).astype(jnp.int32)
    # Merge x and target ids into one (p_pad, 2*PK) array (halves the number
    # of lane-padded id buffers).  Padded targets get the out-of-range id `w`.
    ids = jnp.concatenate(
        [jnp.pad(x_flat, (0, n_pad - N)).reshape(p_pad, pk),
         jnp.pad(t_flat, (0, n_pad - N), constant_values=w).reshape(p_pad, pk)],
        axis=1)

    packed, partials = pl.pallas_call(
        functools.partial(_fused_kernel, pk=pk, v=V, n_valid=N, tile_p=tile_p),
        out_shape=(jax.ShapeDtypeStruct((p_pad, w), jnp.float32),
                   jax.ShapeDtypeStruct((grid_steps, 1), jnp.float32)),
        grid=(grid_steps,),
        in_specs=[_id_spec(2 * pk), tbl_spec],
        out_specs=(logit_spec,
                   pl.BlockSpec((1, 1), lambda i: (i, 0),
                                memory_space=pltpu.MemorySpace.SMEM)),
        compiler_params=pltpu.CompilerParams(
            dimension_semantics=("parallel",),
            vmem_limit_bytes=VMEM_LIMIT),
    )(ids, tbl)

    loss = jnp.sum(partials) * (1.0 / N)
    # PyTorch returns the .view(B*S, V) tensor when targets are given.
    return _unpack_logits(packed), loss


char_v1_forward = jax.jit(_char_v1_forward)


# ---------------------------------------------------------------------------
# Self-check
# ---------------------------------------------------------------------------
def _ref_forward(x, table, targets=None):
    v = table.shape[0]
    logits = jnp.take(table, x.reshape(-1), axis=0)
    if targets is None:
        return logits.reshape(*x.shape, v), None
    m = jnp.max(logits, axis=-1, keepdims=True)
    lse = (m + jnp.log(jnp.sum(jnp.exp(logits - m), axis=-1, keepdims=True)))[:, 0]
    tgt = jnp.take_along_axis(logits, targets.reshape(-1, 1), axis=-1)[:, 0]
    return logits, jnp.mean(lse - tgt)


if __name__ == "__main__":
    vocab_size = 64
    context_size = 16
    B, S = 2, 8

    key = jax.random.PRNGKey(0)
    k_tbl, k_x, k_t = jax.random.split(key, 3)

    # Deterministic parameter init (nn.Embedding default ~ N(0, 1)).
    tkn_emb_table = jax.random.normal(k_tbl, (vocab_size, vocab_size),
                                      dtype=jnp.float32)
    x = jax.random.randint(k_x, (B, S), 0, vocab_size, dtype=jnp.int32)
    targets = jax.random.randint(k_t, (B, S), 0, vocab_size, dtype=jnp.int32)

    # Path 1: no targets -> (B, S, V) logits, loss None.
    logits_inf, loss_inf = char_v1_forward(x, tkn_emb_table)
    logits_inf = jax.block_until_ready(logits_inf)
    assert logits_inf.shape == (B, S, vocab_size)
    assert loss_inf is None

    # Path 2: with targets -> (B*S, V) logits and scalar mean CE loss.
    logits_tr, loss_tr = char_v1_forward(x, tkn_emb_table, targets=targets)
    jax.block_until_ready((logits_tr, loss_tr))
    assert logits_tr.shape == (B * S, vocab_size)

    ref_logits, _ = _ref_forward(x, tkn_emb_table)
    _, ref_loss = _ref_forward(x, tkn_emb_table, targets=targets)
    assert jnp.allclose(logits_inf, ref_logits, atol=1e-5, rtol=1e-5)
    assert jnp.allclose(logits_tr, ref_logits.reshape(-1, vocab_size),
                        atol=1e-5, rtol=1e-5)
    assert jnp.allclose(loss_tr, ref_loss, atol=1e-5, rtol=1e-5)

    # Ragged case (N=15 is odd with PK=2) exercises the pad/mask path.
    B2, S2 = 3, 5
    x2 = jax.random.randint(jax.random.PRNGKey(1), (B2, S2), 0, vocab_size,
                            dtype=jnp.int32)
    t2 = jax.random.randint(jax.random.PRNGKey(2), (B2, S2), 0, vocab_size,
                            dtype=jnp.int32)
    l2, loss2 = char_v1_forward(x2, tkn_emb_table, targets=t2)
    jax.block_until_ready((l2, loss2))
    ref_l2, _ = _ref_forward(x2, tkn_emb_table)
    _, ref_loss2 = _ref_forward(x2, tkn_emb_table, targets=t2)
    assert l2.shape == (B2 * S2, vocab_size)
    assert jnp.allclose(l2, ref_l2.reshape(-1, vocab_size), atol=1e-5, rtol=1e-5)
    assert jnp.allclose(loss2, ref_loss2, atol=1e-5, rtol=1e-5)

    print("KERNEL_OK")
</pallas_src>

<mosaic_0001>
module attributes {stable_mosaic.version = 11 : i64} {
  func.func @_embed_kernel(%arg0: i32, %arg1: memref<8x2xi32, #tpu.memory_space<vmem>>, %arg2: memref<128x128xf32, #tpu.memory_space<vmem>>, %arg3: memref<8x128xf32, #tpu.memory_space<vmem>>) attributes {dimension_semantics = [#tpu.dimension_semantics<parallel>], iteration_bounds = array<i64: 1>, scalar_prefetch = 0 : i64, scratch_operands = 0 : i64, tpu.core_type = #tpu.core_type<tc>, window_params = [{transform_indices = @transform_0, window_bounds = array<i64: 8, 2>}, {pipeline_mode = #tpu.pipeline_mode<synchronous>, transform_indices = @transform_1, window_bounds = array<i64: 128, 128>}, {transform_indices = @transform_2, window_bounds = array<i64: 8, 128>}]} {
    %0 = tpu.iota {dimensions = array<i32: 1>} : vector<8x128xi32>
    %c0 = arith.constant 0 : index
    %c0_0 = arith.constant 0 : index
    %1 = vector.load %arg1[%c0, %c0_0] : memref<8x2xi32, #tpu.memory_space<vmem>>, vector<8x2xi32>
    %2 = vector.extract_strided_slice %1 {offsets = [0, 0], sizes = [8, 1], strides = [1, 1]} : vector<8x2xi32> to vector<8x1xi32>
    %3 = vector.broadcast %2 : vector<8x1xi32> to vector<8x128xi32>
    %4 = arith.cmpi eq, %0, %3 : vector<8x128xi32>
    %5 = vector.extract_strided_slice %1 {offsets = [0, 1], sizes = [8, 1], strides = [1, 1]} : vector<8x2xi32> to vector<8x1xi32>
    %c64_i32 = arith.constant 64 : i32
    %6 = vector.broadcast %c64_i32 : i32 to vector<8x1xi32>
    %7 = arith.addi %5, %6 : vector<8x1xi32>
    %8 = vector.broadcast %7 : vector<8x1xi32> to vector<8x128xi32>
    %9 = arith.cmpi eq, %0, %8 : vector<8x128xi32>
    %10 = arith.ori %4, %9 : vector<8x128xi1>
    %11 = arith.extui %10 : vector<8x128xi1> to vector<8x128xi32>
    %12 = arith.sitofp %11 : vector<8x128xi32> to vector<8x128xf32>
    %c0_1 = arith.constant 0 : index
    %c0_2 = arith.constant 0 : index
    %13 = vector.load %arg2[%c0_1, %c0_2] : memref<128x128xf32, #tpu.memory_space<vmem>>, vector<128x128xf32>
    %cst = arith.constant dense<0.000000e+00> : vector<8x128xf32>
    %14 = tpu.matmul %12, %13, %cst {dimension_numbers = #tpu.dot_dimension_numbers<[1], [0], [0], [1], [0, 0, 1, 1], [], []>} : vector<8x128xf32>, vector<128x128xf32>, vector<8x128xf32> -> vector<8x128xf32>
    %c0_3 = arith.constant 0 : index
    %c0_4 = arith.constant 0 : index
    %15 = vector.load %arg3[%c0_3, %c0_4] : memref<8x128xf32, #tpu.memory_space<vmem>>, vector<8x128xf32>
    tpu.vector_store %arg3[%c0_3, %c0_4], %14 {strides = array<i32>} : memref<8x128xf32, #tpu.memory_space<vmem>>, vector<8x128xf32>,
    return
  }
  func.func @transform_0(%arg0: i32) -> (i32, i32) {
    %c0_i32 = arith.constant 0 : i32
    %c0_i32_0 = arith.constant 0 : i32
    return %arg0, %c0_i32 : i32, i32
  }
  func.func @transform_1(%arg0: i32) -> (i32, i32) {
    %c0_i32 = arith.constant 0 : i32
    %c0_i32_0 = arith.constant 0 : i32
    %c0_i32_1 = arith.constant 0 : i32
    return %c0_i32, %c0_i32_0 : i32, i32
  }
  func.func @transform_2(%arg0: i32) -> (i32, i32) {
    %c0_i32 = arith.constant 0 : i32
    %c0_i32_0 = arith.constant 0 : i32
    return %arg0, %c0_i32 : i32, i32
  }
}

</mosaic_0001>

<llo_original>
// kernel: _char_v1_forward.1
$region0: #{_char_v1_forward.1}
  #allocation0 [shape = 'u32[]', space=smem, size = 0x4, offset = 0x4, fixed_abs, tag = 'smem constant byte address 0x4 - core index']
  #allocation1 [shape = 'u32[144,128]{1,0:T(1,128)}', space=vmem, size = 0x12000, scoped, tag = 'internal scratch']
  %s0 = inlined_call_operand.vmem [shape: s32[8,2], index: 0, kind: input, shape index: {}]
  %s1 = inlined_call_operand.vmem [shape: f32[128,128], index: 1, kind: input, shape index: {}]
  %s2 = inlined_call_operand.vmem [shape: f32[8,128], index: 2, kind: output, shape index: {}]
  %s3 = sld [smem:[#allocation0]]
  $region18: #{_char_v1_forward.1} parent=0
    _
  %s5 = ssub.s32 1, %s3
  %s6 = scalar_select 0, %s5, %s3
  // Predicated region
  $region2: #{_char_v1_forward.1} parent=0 // pred_check
    _
  $region3: #{_char_v1_forward.1} parent=0 // pred_check_branch
    %8 = sbr.rel (0) target = $region5
  $region4: #{_char_v1_forward.1} parent=0 // pred_region
    _
  $region5: #{_char_v1_forward.1} parent=0 // pred_fallthru
    _
  // Predicated region
  $region6: #{_char_v1_forward.1} parent=0 // pred_check
    _
  $region7: #{_char_v1_forward.1} parent=0 // pred_check_branch
    %10 = sbr.rel (0) target = $region9
  $region8: #{_char_v1_forward.1} parent=0 // pred_region
    _
  $region9: #{_char_v1_forward.1} parent=0 // pred_fallthru
    _
  %v11 = vlaneseq
  %v12 = vand.u32 %v11, 127
  %v13 = vld [vmem:[%s0] sm:$0xff]
  %14 = vset.pattern.permute.xlu0 0
  %15 = vperm.xlu0 %14, %v13
  %v16 = vpop.permute.xlu0 %15
  %vm17 = vcmp.eq.s32.totalorder %v12, %v16
  %v18 = vadd.s32 %v13, 64
  %19 = vset.pattern.permute.xlu0 1
  %20 = vperm.xlu0 %19, %v18
  %v21 = vpop.permute.xlu0 %20
  %vm22 = vcmp.eq.s32.totalorder %v12, %v21
  %vm23 = vmor %vm17, %vm22
  %v24 = vsel %vm23, 1, 0
  %v25 = vcvt.s32.f32 %v24
  %v26 = vld [vmem:[%s1] sm:$0xff]
  %v27 = vld [vmem:[%s1 + $0x8] sm:$0xff]
  %v28 = vld [vmem:[%s1 + $0x10] sm:$0xff]
  %v29 = vld [vmem:[%s1 + $0x18] sm:$0xff]
  %v30 = vld [vmem:[%s1 + $0x20] sm:$0xff]
  %v31 = vld [vmem:[%s1 + $0x28] sm:$0xff]
  %v32 = vld [vmem:[%s1 + $0x30] sm:$0xff]
  %v33 = vld [vmem:[%s1 + $0x38] sm:$0xff]
  %v34 = vld [vmem:[%s1 + $0x40] sm:$0xff]
  %v35 = vld [vmem:[%s1 + $0x48] sm:$0xff]
  %v36 = vld [vmem:[%s1 + $0x50] sm:$0xff]
  %v37 = vld [vmem:[%s1 + $0x58] sm:$0xff]
  %v38 = vld [vmem:[%s1 + $0x60] sm:$0xff]
  %v39 = vld [vmem:[%s1 + $0x68] sm:$0xff]
  %v40 = vld [vmem:[%s1 + $0x70] sm:$0xff]
  %v41 = vld [vmem:[%s1 + $0x78] sm:$0xff]
  %42 = vmatprep.subr.mxu0 0.0
  %43 = vmatpush1.msra.mxu0 %v41
  %44 = vmatprep.subr.mxu0 0.0
  %45 = vmatpush1.msra.mxu0 %v40
  %46 = vmatprep.subr.mxu0 0.0
  %47 = vmatpush1.msra.mxu0 %v39
  %48 = vmatprep.subr.mxu0 0.0
  %49 = vmatpush1.msra.mxu0 %v38
  %50 = vmatprep.subr.mxu0 0.0
  %51 = vmatpush1.msra.mxu0 %v37
  %52 = vmatprep.subr.mxu0 0.0
  %53 = vmatpush1.msra.mxu0 %v36
  %54 = vmatprep.subr.mxu0 0.0
  %55 = vmatpush1.msra.mxu0 %v35
  %56 = vmatprep.subr.mxu0 0.0
  %57 = vmatpush1.msra.mxu0 %v34
  %58 = vmatprep.subr.mxu0 0.0
  %59 = vmatpush1.msra.mxu0 %v33
  %60 = vmatprep.subr.mxu0 0.0
  %61 = vmatpush1.msra.mxu0 %v32
  %62 = vmatprep.subr.mxu0 0.0
  %63 = vmatpush1.msra.mxu0 %v31
  %64 = vmatprep.subr.mxu0 0.0
  %65 = vmatpush1.msra.mxu0 %v30
  %66 = vmatprep.subr.mxu0 0.0
  %67 = vmatpush1.msra.mxu0 %v29
  %68 = vmatprep.subr.mxu0 0.0
  %69 = vmatpush1.msra.mxu0 %v28
  %70 = vmatprep.subr.mxu0 0.0
  %71 = vmatpush1.msra.mxu0 %v27
  %72 = vmatprep.subr.mxu0 0.0
  %73 = vmatpush1.msra.mxu0 %v26
  %74 = vmatprep.subr.mxu0 0.0
  %75 = vmatpush2.msra.mxu0 0.0
  %76 = vmatprep.subr.mxu0 0.0
  %77 = vmatpush2.msra.mxu0 0.0
  %78 = vmatprep.subr.mxu0 0.0
  %79 = vmatpush2.msra.mxu0 0.0
  %80 = vmatprep.subr.mxu0 0.0
  %81 = vmatpush2.msra.mxu0 0.0
  %82 = vmatprep.subr.mxu0 0.0
  %83 = vmatpush2.msra.mxu0 0.0
  %84 = vmatprep.subr.mxu0 0.0
  %85 = vmatpush2.msra.mxu0 0.0
  %86 = vmatprep.subr.mxu0 0.0
  %87 = vmatpush2.msra.mxu0 0.0
  %88 = vmatprep.subr.mxu0 0.0
  %89 = vmatpush2.msra.mxu0 0.0
  %90 = vmatprep.subr.mxu0 0.0
  %91 = vmatpush2.msra.mxu0 0.0
  %92 = vmatprep.subr.mxu0 0.0
  %93 = vmatpush2.msra.mxu0 0.0
  %94 = vmatprep.subr.mxu0 0.0
  %95 = vmatpush2.msra.mxu0 0.0
  %96 = vmatprep.subr.mxu0 0.0
  %97 = vmatpush2.msra.mxu0 0.0
  %98 = vmatprep.subr.mxu0 0.0
  %99 = vmatpush2.msra.mxu0 0.0
  %100 = vmatprep.subr.mxu0 0.0
  %101 = vmatpush2.msra.mxu0 0.0
  %102 = vmatprep.subr.mxu0 0.0
  %103 = vmatpush2.msra.mxu0 0.0
  %104 = vmatprep.subr.mxu0 0.0
  %105 = vmatpush2.msra.mxu0 0.0
  %106 = vmatprep.mubr.f32.mxu0 0.0
  %107 = vmatmul.mubr.f32.gmra.mxu0 %v25
  %v108 = vpop.f32.mrf.mxu0
  %v109 = vadd.f32 0.0, %v108
  %v110 = vpop.f32.mrf.mxu0
  %111 = vdwg.mxu0
  %112 = vst [vmem:[%s2] sm:$0xff] %v109
  // Predicated region
  $region10: #{_char_v1_forward.1} parent=0 // pred_check
    _
  $region11: #{_char_v1_forward.1} parent=0 // pred_check_branch
    %114 = sbr.rel (0) target = $region13
  $region12: #{_char_v1_forward.1} parent=0 // pred_region
    _
  $region13: #{_char_v1_forward.1} parent=0 // pred_fallthru
    _
  // Predicated region
  $region14: #{_char_v1_forward.1} parent=0 // pred_check
    _
  $region15: #{_char_v1_forward.1} parent=0 // pred_check_branch
    %116 = sbr.rel (0) target = $region17
  $region16: #{_char_v1_forward.1} parent=0 // pred_region
    _
  $region17: #{_char_v1_forward.1} parent=0 // pred_fallthru
    _

</llo_original>
